<compile_context>
chip_gen: v7x
topology: tpu7x:2x2x1
jax: 0.10.0
libtpu: 0.0.40
codegen_flags: <defaults>
</compile_context>

<pallas_src>
import functools
import math

import jax
import jax.numpy as jnp
from jax.experimental import pallas as pl
from jax.experimental.pallas import tpu as pltpu

BN_EPS = 1e-5


def block1_kernel(x_ref, scale_ref, shift_ref, w_ref, b_ref, o_ref, *, width):
    """One (n, hw-tile) block.

    x_ref:     (1, C, L)      input tile, NCHW with H*W flattened onto lanes
    scale_ref: (C, 1)         folded BN scale  = gamma * rsqrt(var + eps)
    shift_ref: (C, 1)         folded BN shift  = beta - mean * scale
    w_ref:     (3, Cout, Cin) conv taps; index 0/1/2 <-> input at w-1 / w / w+1
    b_ref:     (Cout, 1)      conv bias
    o_ref:     (1, Cout, L)   output tile
    """
    x = x_ref[0]                                            # (C, L) f32
    L = x.shape[-1]

    # ---- BatchNorm (pre-folded affine) + ReLU: one FMA + max on the VPU ----
    act = jnp.maximum(x * scale_ref[...] + shift_ref[...], 0.0)

    # ---- W-shifted taps via XLU lane rolls.  Positions whose neighbor falls
    # outside a width-`width` row are masked to zero (== the conv's zero pad).
    # L % width == 0, so the circular wrap at the tile edge always lands on a
    # masked position -> NH/HW tiling is halo-free.
    w_pos = jax.lax.broadcasted_iota(jnp.int32, (1, L), 1) % width
    left = pltpu.roll(act, shift=1, axis=1)                 # act at w-1
    right = pltpu.roll(act, shift=L - 1, axis=1)            # act at w+1
    left = jnp.where(w_pos == 0, 0.0, left)
    right = jnp.where(w_pos == width - 1, 0.0, right)

    # ---- 1x3 conv: three small MXU matmuls contracting over Cin, f32 accum.
    acc = jnp.dot(w_ref[0], left, preferred_element_type=jnp.float32)
    acc = acc + jnp.dot(w_ref[1], act, preferred_element_type=jnp.float32)
    acc = acc + jnp.dot(w_ref[2], right, preferred_element_type=jnp.float32)

    # ---- bias + residual + ReLU, single lane-dense store per tile.
    o_ref[0] = jnp.maximum(acc + b_ref[...] + x, 0.0)


def _choose_tile_hw(H, W, max_lanes=8192):
    """Largest lane tile that is a multiple of W (mask alignment) and 128."""
    HW = H * W
    if HW <= max_lanes:
        return HW                       # full extent: always a legal block
    base = (W * 128) // math.gcd(W, 128)
    if HW % base != 0:
        # TODO(synk): pad H*W up to a multiple of lcm(W, 128) for huge,
        # non-aligned spatial sizes instead of falling back to one tile.
        return HW
    tile, m = base, base
    while m <= max_lanes:
        if HW % m == 0:
            tile = m
        m += base
    return tile


def block1_forward(x_nchw, gamma, beta, conv_w, conv_b, *, tile_hw=None):
    """x_nchw: (N, C, H, W) f32.  conv_w: (Cout, Cin, 1, 3).  Returns NCHW."""
    N, C, H, W = x_nchw.shape
    HW = H * W

    if tile_hw is None:
        tile_hw = _choose_tile_hw(H, W)
    if (HW % tile_hw) or (tile_hw % W) or (tile_hw % 128 and tile_hw != HW):
        tile_hw = HW                    # fallback: single tile along H*W

    # ---- BatchNorm2d training-mode batch stats, folded to scale/shift ------
    # (stats must be global, so they are computed outside the tiled kernel)
    mean = jnp.mean(x_nchw, axis=(0, 2, 3))
    var = jnp.mean(jnp.square(x_nchw - mean.reshape(1, C, 1, 1)), axis=(0, 2, 3))
    scale = gamma * jax.lax.rsqrt(var + BN_EPS)             # (C,)
    shift = beta - mean * scale                             # (C,)

    # (Cout, Cin, 1, 3) -> (3, Cout, Cin):  w3[kw] multiplies input at w+kw-1
    w3 = jnp.transpose(conv_w[:, :, 0, :], (2, 0, 1))

    # NCHW kept as-is; flatten (H, W) onto lanes -- a free reshape, no transpose.
    x3 = x_nchw.reshape(N, C, HW)

    grid = (N, HW // tile_hw)
    out = pl.pallas_call(
        functools.partial(block1_kernel, width=W),
        out_shape=jax.ShapeDtypeStruct((N, C, HW), jnp.float32),
        grid=grid,
        in_specs=[
            pl.BlockSpec((1, C, tile_hw), lambda n, t: (n, 0, t)),
            pl.BlockSpec((C, 1), lambda n, t: (0, 0)),       # scale (loaded once)
            pl.BlockSpec((C, 1), lambda n, t: (0, 0)),       # shift (loaded once)
            pl.BlockSpec((3, C, C), lambda n, t: (0, 0, 0)),  # conv weights
            pl.BlockSpec((C, 1), lambda n, t: (0, 0)),       # conv bias
        ],
        out_specs=pl.BlockSpec((1, C, tile_hw), lambda n, t: (n, 0, t)),
        compiler_params=pltpu.CompilerParams(
            dimension_semantics=("parallel", "parallel"),
            vmem_limit_bytes=32 * 1024 * 1024,
        ),
    )(x3, scale.reshape(C, 1), shift.reshape(C, 1), w3, conv_b.reshape(C, 1))

    return out.reshape(N, C, H, W)


def block1_reference(x_nchw, gamma, beta, conv_w, conv_b):
    """Pure-JAX reference (mirrors the PyTorch module, training-mode BN)."""
    mean = jnp.mean(x_nchw, axis=(0, 2, 3), keepdims=True)
    var = jnp.mean((x_nchw - mean) ** 2, axis=(0, 2, 3), keepdims=True)
    xhat = (x_nchw - mean) / jnp.sqrt(var + BN_EPS)
    bn = xhat * gamma.reshape(1, -1, 1, 1) + beta.reshape(1, -1, 1, 1)
    act = jnp.maximum(bn, 0.0)
    conv = jax.lax.conv_general_dilated(
        act, conv_w, window_strides=(1, 1), padding=((0, 0), (1, 1)),
        dimension_numbers=("NCHW", "OIHW", "NCHW"))
    conv = conv + conv_b.reshape(1, -1, 1, 1)
    return jnp.maximum(conv + x_nchw, 0.0)


if __name__ == "__main__":
    N, C, H, W = 2, 16, 16, 16      # inplanes = outplanes = 16 (module defaults)

    key = jax.random.PRNGKey(0)
    kx, kg, kb, kw, kc = jax.random.split(key, 5)
    x = jax.random.normal(kx, (N, C, H, W), dtype=jnp.float32)
    gamma = 1.0 + 0.1 * jax.random.normal(kg, (C,), dtype=jnp.float32)
    beta = 0.1 * jax.random.normal(kb, (C,), dtype=jnp.float32)
    conv_w = 0.1 * jax.random.normal(kw, (C, C, 1, 3), dtype=jnp.float32)
    conv_b = 0.1 * jax.random.normal(kc, (C,), dtype=jnp.float32)

    # tile_hw=128 -> grid=(2, 2): exercises the pipelined grid at demo size.
    out = block1_forward(x, gamma, beta, conv_w, conv_b, tile_hw=128)
    jax.block_until_ready(out)

    ref = block1_reference(x, gamma, beta, conv_w, conv_b)
    assert out.shape == (N, C, H, W)
    err = float(jnp.max(jnp.abs(out - ref)))
    assert err < 2e-4, f"mismatch vs reference: max abs err = {err}"

    print("KERNEL_OK")
</pallas_src>

<mosaic_0001>
module attributes {stable_mosaic.version = 11 : i64} {
  func.func @block1_kernel(%arg0: i32, %arg1: i32, %arg2: memref<1x16x128xf32, #tpu.memory_space<vmem>>, %arg3: memref<16x1xf32, #tpu.memory_space<vmem>>, %arg4: memref<16x1xf32, #tpu.memory_space<vmem>>, %arg5: memref<3x16x16xf32, #tpu.memory_space<vmem>>, %arg6: memref<16x1xf32, #tpu.memory_space<vmem>>, %arg7: memref<1x16x128xf32, #tpu.memory_space<vmem>>) attributes {dimension_semantics = [#tpu.dimension_semantics<parallel>, #tpu.dimension_semantics<parallel>], iteration_bounds = array<i64: 2, 2>, scalar_prefetch = 0 : i64, scratch_operands = 0 : i64, tpu.core_type = #tpu.core_type<tc>, window_params = [{transform_indices = @transform_0, window_bounds = array<i64: 1, 16, 128>}, {pipeline_mode = #tpu.pipeline_mode<synchronous>, transform_indices = @transform_1, window_bounds = array<i64: 16, 1>}, {pipeline_mode = #tpu.pipeline_mode<synchronous>, transform_indices = @transform_2, window_bounds = array<i64: 16, 1>}, {pipeline_mode = #tpu.pipeline_mode<synchronous>, transform_indices = @transform_3, window_bounds = array<i64: 3, 16, 16>}, {pipeline_mode = #tpu.pipeline_mode<synchronous>, transform_indices = @transform_4, window_bounds = array<i64: 16, 1>}, {transform_indices = @transform_5, window_bounds = array<i64: 1, 16, 128>}]} {
    %c0 = arith.constant 0 : index
    %c0_0 = arith.constant 0 : index
    %c0_1 = arith.constant 0 : index
    %0 = vector.load %arg2[%c0, %c0_0, %c0_1] : memref<1x16x128xf32, #tpu.memory_space<vmem>>, vector<1x16x128xf32>
    %1 = vector.shape_cast %0 : vector<1x16x128xf32> to vector<16x128xf32>
    %c0_2 = arith.constant 0 : index
    %c0_3 = arith.constant 0 : index
    %2 = vector.load %arg3[%c0_2, %c0_3] : memref<16x1xf32, #tpu.memory_space<vmem>>, vector<16x1xf32>
    %3 = vector.broadcast %2 : vector<16x1xf32> to vector<16x128xf32>
    %4 = arith.mulf %1, %3 : vector<16x128xf32>
    %c0_4 = arith.constant 0 : index
    %c0_5 = arith.constant 0 : index
    %5 = vector.load %arg4[%c0_4, %c0_5] : memref<16x1xf32, #tpu.memory_space<vmem>>, vector<16x1xf32>
    %6 = vector.broadcast %5 : vector<16x1xf32> to vector<16x128xf32>
    %7 = arith.addf %4, %6 : vector<16x128xf32>
    %cst = arith.constant 0.000000e+00 : f32
    %8 = vector.broadcast %cst : f32 to vector<16x128xf32>
    %9 = arith.maximumf %7, %8 : vector<16x128xf32>
    %10 = tpu.iota {dimensions = array<i32: 1>} : vector<1x128xi32>
    %c16_i32 = arith.constant 16 : i32
    %c0_i32 = arith.constant 0 : i32
    %11 = arith.cmpi eq, %c16_i32, %c0_i32 : i32
    %c1_i32 = arith.constant 1 : i32
    %12 = arith.select %11, %c1_i32, %c16_i32 : i32
    %13 = vector.broadcast %12 : i32 to vector<1x128xi32>
    %14 = arith.remsi %10, %13 : vector<1x128xi32>
    %c0_i32_6 = arith.constant 0 : i32
    %15 = vector.broadcast %c0_i32_6 : i32 to vector<1x128xi32>
    %16 = arith.cmpi ne, %14, %15 : vector<1x128xi32>
    %c0_i32_7 = arith.constant 0 : i32
    %17 = vector.broadcast %c0_i32_7 : i32 to vector<1x128xi32>
    %18 = arith.cmpi slt, %14, %17 : vector<1x128xi32>
    %c0_i32_8 = arith.constant 0 : i32
    %19 = arith.cmpi slt, %12, %c0_i32_8 : i32
    %20 = vector.broadcast %19 : i1 to vector<1x128xi1>
    %21 = vector.broadcast %20 : vector<1x128xi1> to vector<1x128xi1>
    %22 = arith.xori %18, %21 : vector<1x128xi1>
    %23 = arith.andi %22, %16 : vector<1x128xi1>
    %24 = vector.broadcast %12 : i32 to vector<1x128xi32>
    %25 = arith.addi %14, %24 : vector<1x128xi32>
    %26 = arith.select %23, %25, %14 : vector<1x128xi1>, vector<1x128xi32>
    %c1_i32_9 = arith.constant 1 : i32
    %27 = tpu.dynamic_rotate %9 by %c1_i32_9 dim 1 : vector<16x128xf32>, i32 -> vector<16x128xf32>
    %c127_i32 = arith.constant 127 : i32
    %28 = tpu.dynamic_rotate %9 by %c127_i32 dim 1 : vector<16x128xf32>, i32 -> vector<16x128xf32>
    %c0_i32_10 = arith.constant 0 : i32
    %29 = vector.broadcast %c0_i32_10 : i32 to vector<1x128xi32>
    %30 = arith.cmpi eq, %26, %29 : vector<1x128xi32>
    %cst_11 = arith.constant 0.000000e+00 : f32
    %31 = vector.shape_cast %30 : vector<1x128xi1> to vector<1x128xi1>
    %32 = vector.broadcast %31 : vector<1x128xi1> to vector<16x128xi1>
    %33 = vector.broadcast %cst_11 : f32 to vector<16x128xf32>
    %34 = arith.select %32, %33, %27 : vector<16x128xi1>, vector<16x128xf32>
    %c15_i32 = arith.constant 15 : i32
    %35 = vector.broadcast %c15_i32 : i32 to vector<1x128xi32>
    %36 = arith.cmpi eq, %26, %35 : vector<1x128xi32>
    %cst_12 = arith.constant 0.000000e+00 : f32
    %37 = vector.shape_cast %36 : vector<1x128xi1> to vector<1x128xi1>
    %38 = vector.broadcast %37 : vector<1x128xi1> to vector<16x128xi1>
    %39 = vector.broadcast %cst_12 : f32 to vector<16x128xf32>
    %40 = arith.select %38, %39, %28 : vector<16x128xi1>, vector<16x128xf32>
    %c0_13 = arith.constant 0 : index
    %c0_14 = arith.constant 0 : index
    %c0_15 = arith.constant 0 : index
    %41 = vector.load %arg5[%c0_13, %c0_14, %c0_15] : memref<3x16x16xf32, #tpu.memory_space<vmem>>, vector<1x16x16xf32>
    %42 = vector.shape_cast %41 : vector<1x16x16xf32> to vector<16x16xf32>
    %cst_16 = arith.constant dense<0.000000e+00> : vector<16x128xf32>
    %43 = tpu.matmul %42, %34, %cst_16 {dimension_numbers = #tpu.dot_dimension_numbers<[1], [0], [0], [1], [0, 0, 1, 1], [], []>} : vector<16x16xf32>, vector<16x128xf32>, vector<16x128xf32> -> vector<16x128xf32>
    %c1 = arith.constant 1 : index
    %c0_17 = arith.constant 0 : index
    %c0_18 = arith.constant 0 : index
    %44 = vector.load %arg5[%c1, %c0_17, %c0_18] : memref<3x16x16xf32, #tpu.memory_space<vmem>>, vector<1x16x16xf32>
    %45 = vector.shape_cast %44 : vector<1x16x16xf32> to vector<16x16xf32>
    %cst_19 = arith.constant dense<0.000000e+00> : vector<16x128xf32>
    %46 = tpu.matmul %45, %9, %cst_19 {dimension_numbers = #tpu.dot_dimension_numbers<[1], [0], [0], [1], [0, 0, 1, 1], [], []>} : vector<16x16xf32>, vector<16x128xf32>, vector<16x128xf32> -> vector<16x128xf32>
    %47 = arith.addf %43, %46 : vector<16x128xf32>
    %c2 = arith.constant 2 : index
    %c0_20 = arith.constant 0 : index
    %c0_21 = arith.constant 0 : index
    %48 = vector.load %arg5[%c2, %c0_20, %c0_21] : memref<3x16x16xf32, #tpu.memory_space<vmem>>, vector<1x16x16xf32>
    %49 = vector.shape_cast %48 : vector<1x16x16xf32> to vector<16x16xf32>
    %cst_22 = arith.constant dense<0.000000e+00> : vector<16x128xf32>
    %50 = tpu.matmul %49, %40, %cst_22 {dimension_numbers = #tpu.dot_dimension_numbers<[1], [0], [0], [1], [0, 0, 1, 1], [], []>} : vector<16x16xf32>, vector<16x128xf32>, vector<16x128xf32> -> vector<16x128xf32>
    %51 = arith.addf %47, %50 : vector<16x128xf32>
    %c0_23 = arith.constant 0 : index
    %c0_24 = arith.constant 0 : index
    %52 = vector.load %arg6[%c0_23, %c0_24] : memref<16x1xf32, #tpu.memory_space<vmem>>, vector<16x1xf32>
    %53 = vector.broadcast %52 : vector<16x1xf32> to vector<16x128xf32>
    %54 = arith.addf %51, %53 : vector<16x128xf32>
    %55 = arith.addf %54, %1 : vector<16x128xf32>
    %cst_25 = arith.constant 0.000000e+00 : f32
    %56 = vector.broadcast %cst_25 : f32 to vector<16x128xf32>
    %57 = arith.maximumf %55, %56 : vector<16x128xf32>
    %c0_26 = arith.constant 0 : index
    %c0_27 = arith.constant 0 : index
    %c0_28 = arith.constant 0 : index
    %58 = vector.load %arg7[%c0_26, %c0_27, %c0_28] : memref<1x16x128xf32, #tpu.memory_space<vmem>>, vector<1x16x128xf32>
    %59 = vector.shape_cast %58 : vector<1x16x128xf32> to vector<16x128xf32>
    %60 = vector.shape_cast %57 : vector<16x128xf32> to vector<1x16x128xf32>
    tpu.vector_store %arg7[%c0_26, %c0_27, %c0_28], %60 {strides = array<i32>} : memref<1x16x128xf32, #tpu.memory_space<vmem>>, vector<1x16x128xf32>,
    return
  }
  func.func @transform_0(%arg0: i32, %arg1: i32) -> (i32, i32, i32) {
    %c0_i32 = arith.constant 0 : i32
    %c0_i32_0 = arith.constant 0 : i32
    return %arg0, %c0_i32, %arg1 : i32, i32, i32
  }
  func.func @transform_1(%arg0: i32, %arg1: i32) -> (i32, i32) {
    %c0_i32 = arith.constant 0 : i32
    %c0_i32_0 = arith.constant 0 : i32
    %c0_i32_1 = arith.constant 0 : i32
    return %c0_i32, %c0_i32_0 : i32, i32
  }
  func.func @transform_2(%arg0: i32, %arg1: i32) -> (i32, i32) {
    %c0_i32 = arith.constant 0 : i32
    %c0_i32_0 = arith.constant 0 : i32
    %c0_i32_1 = arith.constant 0 : i32
    return %c0_i32, %c0_i32_0 : i32, i32
  }
  func.func @transform_3(%arg0: i32, %arg1: i32) -> (i32, i32, i32) {
    %c0_i32 = arith.constant 0 : i32
    %c0_i32_0 = arith.constant 0 : i32
    %c0_i32_1 = arith.constant 0 : i32
    %c0_i32_2 = arith.constant 0 : i32
    return %c0_i32, %c0_i32_0, %c0_i32_1 : i32, i32, i32
  }
  func.func @transform_4(%arg0: i32, %arg1: i32) -> (i32, i32) {
    %c0_i32 = arith.constant 0 : i32
    %c0_i32_0 = arith.constant 0 : i32
    %c0_i32_1 = arith.constant 0 : i32
    return %c0_i32, %c0_i32_0 : i32, i32
  }
  func.func @transform_5(%arg0: i32, %arg1: i32) -> (i32, i32, i32) {
    %c0_i32 = arith.constant 0 : i32
    %c0_i32_0 = arith.constant 0 : i32
    return %arg0, %c0_i32, %arg1 : i32, i32, i32
  }
}

</mosaic_0001>

<llo_original>
// kernel: tpu_custom_call.1
$region0: #{tpu_custom_call.1}
  #allocation0 [shape = 'u32[]', space=smem, size = 0x4, offset = 0x4, fixed_abs, tag = 'smem constant byte address 0x4 - core index']
  #allocation1 [shape = 'u32[144,128]{1,0:T(1,128)}', space=vmem, size = 0x12000, scoped, tag = 'internal scratch']
  %s0 = inlined_call_operand.hbm [shape: f32[2,16,256], index: 0, kind: input, shape index: {}]
  %s1 = inlined_call_operand.vmem [shape: f32[16,1], index: 1, kind: input, shape index: {}]
  %s2 = inlined_call_operand.vmem [shape: f32[16,1], index: 2, kind: input, shape index: {}]
  %s3 = inlined_call_operand.vmem [shape: f32[3,16,16], index: 3, kind: input, shape index: {}]
  %s4 = inlined_call_operand.vmem [shape: f32[16,1], index: 4, kind: input, shape index: {}]
  %s5 = inlined_call_operand.hbm [shape: f32[2,16,256], index: 5, kind: output, shape index: {}]
  %s6 = sld [smem:[#allocation0]]
  $region57: #{tpu_custom_call.1} parent=0
    _
  %s8 = ssub.s32 1, %s6
  %s9 = scalar_select 0, %s8, %s6
  $region1: #{tpu_custom_call.1} parent=0
    #allocation2 [shape = 'u8[16384]{0}', space=vmem, size = 0x4000, scoped, tag = 'input window, operand 0']
    #allocation3 [shape = 's32[2]{0}', space=sflag, size = 0x8, scoped, tag = 'scoped memory for tpu_custom_call.1']
    #allocation4 [shape = 's32[2]{0}', space=sflag, size = 0x8, scoped, tag = 'scoped memory for tpu_custom_call.1']
    #allocation5 [shape = 'u8[16384]{0}', space=vmem, size = 0x4000, scoped, tag = 'output window, operand 0']
    %10 = vsyncpa [#allocation3], 0
    %s11 = scalar_lea.sflag [#allocation3], 1
    %12 = vsyncpa %s11, 0
    %13 = vsyncpa [#allocation4], 0
    %s14 = scalar_lea.sflag [#allocation4], 1
    %15 = vsyncpa %s14, 0
    loop: start=0, step=1, limit=6
    $region2: #{tpu_custom_call.1} parent=1 // loop_pre_header
      _
    $region3: #{tpu_custom_call.1} parent=1 // loop_header
      %s17 = sphi 0, %s21
      %p18 = scmp.ge.s32.totalorder %s17, 6
      %s24 = sphi 0, %s36
      %s25 = sphi 0, %s32
      %s26 = sphi 0, %s24
      %s27 = sphi 0, %s25
      %s28 = sphi 0, %s26
      %s29 = sphi 0, %s27
      %s41 = sphi 0, %s43
      %s44 = sphi 0, %s41
      %s45 = sphi 0, %s44
      %s61 = sphi 0, %s45
      %s65 = sphi 0, %s65
      %s67 = sphi 0, %s65
      %s68 = sphi 0, %s67
      %s82 = sphi 0, %s68
      %s86 = sphi 0, %s86
      %s88 = sphi 0, %s86
      %s89 = sphi 0, %s88
      %s103 = sphi 0, %s89
      %s107 = sphi 0, %s107
      %s109 = sphi 0, %s107
      %s110 = sphi 0, %s109
      %s124 = sphi 0, %s110
      %s128 = sphi 0, %s128
      %s130 = sphi 0, %s128
      %s131 = sphi 0, %s130
      %s145 = sphi 0, %s131
      %s153 = sphi 0, %s155
      %s156 = sphi 0, %s153
      %s157 = sphi 0, %s156
      %s173 = sphi 0, %s157
    $region4: #{tpu_custom_call.1} parent=1 // loop_header_branch
      %20 = sbr.rel (%p18) target = $region8
    $region5: #{tpu_custom_call.1} parent=1 // loop_body
      %s22 = ssub.s32 %s17, 1
      %s23 = ssub.s32 %s17, 2
      %s30 = sadd.s32 1, %s25
      %p31 = scmp.ge.s32.totalorder %s30, 2
      %s32 = scalar_select %p31, 0, %s30
      %s33 = sadd.s32 1, %s24
      %s34 = scalar_select %p31, %s33, %s24
      %p35 = scmp.ge.s32.totalorder %s34, 2
      %s36 = scalar_select %p35, 0, %s34
      %s37 = ssub.s32 %s24, %s36
      %s38 = ssub.s32 %s25, %s32
      %s39 = sor.u32 %s37, %s38
      %p40 = scmp.eq.s32.totalorder %s39, 0
      %s42 = sadd.s32 %s41, 1
      %s43 = scalar_select %p40, %s41, %s42
      %p46 = pneg %p40
      %p47 = scmp.eq.s32.totalorder %s17, 3
      %p48 = por %p46, %p47
      %p49 = scmp.ne.s32.totalorder %s41, %s44
      %p50 = scmp.eq.s32.totalorder %s17, 0
      %p51 = por %p49, %p50
      %p52 = scmp.ne.s32.totalorder %s41, %s44
      %p53 = scmp.eq.s32.totalorder %s22, 3
      %p54 = por %p52, %p53
      %p55 = scmp.ne.s32.totalorder %s44, %s45
      %p56 = scmp.eq.s32.totalorder %s22, 0
      %p57 = por %p55, %p56
      %p58 = scmp.ne.s32.totalorder %s44, %s45
      %p59 = scmp.eq.s32.totalorder %s23, 3
      %p60 = por %p58, %p59
      %p62 = scmp.ne.s32.totalorder %s45, %s61
      %p63 = scmp.eq.s32.totalorder %s23, 0
      %p64 = por %p62, %p63
      %s66 = sadd.s32 %s65, 1
      %p69 = scmp.eq.s32.totalorder %s17, 3
      %p70 = scmp.ne.s32.totalorder %s65, %s67
      %p71 = scmp.eq.s32.totalorder %s17, 0
      %p72 = por %p70, %p71
      %p73 = scmp.ne.s32.totalorder %s65, %s67
      %p74 = scmp.eq.s32.totalorder %s22, 3
      %p75 = por %p73, %p74
      %p76 = scmp.ne.s32.totalorder %s67, %s68
      %p77 = scmp.eq.s32.totalorder %s22, 0
      %p78 = por %p76, %p77
      %p79 = scmp.ne.s32.totalorder %s67, %s68
      %p80 = scmp.eq.s32.totalorder %s23, 3
      %p81 = por %p79, %p80
      %p83 = scmp.ne.s32.totalorder %s68, %s82
      %p84 = scmp.eq.s32.totalorder %s23, 0
      %p85 = por %p83, %p84
      %s87 = sadd.s32 %s86, 1
      %p90 = scmp.eq.s32.totalorder %s17, 3
      %p91 = scmp.ne.s32.totalorder %s86, %s88
      %p92 = scmp.eq.s32.totalorder %s17, 0
      %p93 = por %p91, %p92
      %p94 = scmp.ne.s32.totalorder %s86, %s88
      %p95 = scmp.eq.s32.totalorder %s22, 3
      %p96 = por %p94, %p95
      %p97 = scmp.ne.s32.totalorder %s88, %s89
      %p98 = scmp.eq.s32.totalorder %s22, 0
      %p99 = por %p97, %p98
      %p100 = scmp.ne.s32.totalorder %s88, %s89
      %p101 = scmp.eq.s32.totalorder %s23, 3
      %p102 = por %p100, %p101
      %p104 = scmp.ne.s32.totalorder %s89, %s103
      %p105 = scmp.eq.s32.totalorder %s23, 0
      %p106 = por %p104, %p105
      %s108 = sadd.s32 %s107, 1
      %p111 = scmp.eq.s32.totalorder %s17, 3
      %p112 = scmp.ne.s32.totalorder %s107, %s109
      %p113 = scmp.eq.s32.totalorder %s17, 0
      %p114 = por %p112, %p113
      %p115 = scmp.ne.s32.totalorder %s107, %s109
      %p116 = scmp.eq.s32.totalorder %s22, 3
      %p117 = por %p115, %p116
      %p118 = scmp.ne.s32.totalorder %s109, %s110
      %p119 = scmp.eq.s32.totalorder %s22, 0
      %p120 = por %p118, %p119
      %p121 = scmp.ne.s32.totalorder %s109, %s110
      %p122 = scmp.eq.s32.totalorder %s23, 3
      %p123 = por %p121, %p122
      %p125 = scmp.ne.s32.totalorder %s110, %s124
      %p126 = scmp.eq.s32.totalorder %s23, 0
      %p127 = por %p125, %p126
      %s129 = sadd.s32 %s128, 1
      %p132 = scmp.eq.s32.totalorder %s17, 3
      %p133 = scmp.ne.s32.totalorder %s128, %s130
      %p134 = scmp.eq.s32.totalorder %s17, 0
      %p135 = por %p133, %p134
      %p136 = scmp.ne.s32.totalorder %s128, %s130
      %p137 = scmp.eq.s32.totalorder %s22, 3
      %p138 = por %p136, %p137
      %p139 = scmp.ne.s32.totalorder %s130, %s131
      %p140 = scmp.eq.s32.totalorder %s22, 0
      %p141 = por %p139, %p140
      %p142 = scmp.ne.s32.totalorder %s130, %s131
      %p143 = scmp.eq.s32.totalorder %s23, 3
      %p144 = por %p142, %p143
      %p146 = scmp.ne.s32.totalorder %s131, %s145
      %p147 = scmp.eq.s32.totalorder %s23, 0
      %p148 = por %p146, %p147
      %s149 = ssub.s32 %s24, %s36
      %s150 = ssub.s32 %s25, %s32
      %s151 = sor.u32 %s149, %s150
      %p152 = scmp.eq.s32.totalorder %s151, 0
      %s154 = sadd.s32 %s153, 1
      %s155 = scalar_select %p152, %s153, %s154
      %p158 = pneg %p152
      %p159 = scmp.eq.s32.totalorder %s17, 3
      %p160 = por %p158, %p159
      %p161 = scmp.ne.s32.totalorder %s153, %s156
      %p162 = scmp.eq.s32.totalorder %s17, 0
      %p163 = por %p161, %p162
      %p164 = scmp.ne.s32.totalorder %s153, %s156
      %p165 = scmp.eq.s32.totalorder %s22, 3
      %p166 = por %p164, %p165
      %p167 = scmp.ne.s32.totalorder %s156, %s157
      %p168 = scmp.eq.s32.totalorder %s22, 0
      %p169 = por %p167, %p168
      %p170 = scmp.ne.s32.totalorder %s156, %s157
      %p171 = scmp.eq.s32.totalorder %s23, 3
      %p172 = por %p170, %p171
      %p174 = scmp.ne.s32.totalorder %s157, %s173
      %p175 = scmp.eq.s32.totalorder %s23, 0
      %p176 = por %p174, %p175
      %p177 = scmp.le.s32.totalorder 1, %s17
      %p178 = scmp.lt.s32.totalorder %s17, 5
      %p179 = pnand %p177, %p178
      %p180 = pneg %p179
      // Predicated region
      $region9: #{tpu_custom_call.1} parent=5 // pred_check
        _
      $region10: #{tpu_custom_call.1} parent=5 // pred_check_branch
        %182 = sbr.rel (%p179) target = $region12
      $region11: #{tpu_custom_call.1} parent=5 // pred_region
        %s183 = ssub.s32 %s17, 1
        // Predicated region
        $region13: #{tpu_custom_call.1} parent=11 // pred_check
          %p184 = pneg %p78
        $region14: #{tpu_custom_call.1} parent=11 // pred_check_branch
          %186 = sbr.rel (%p184) target = $region16
        $region15: #{tpu_custom_call.1} parent=11 // pred_region
          _
        $region16: #{tpu_custom_call.1} parent=11 // pred_fallthru
          _
        // Predicated region
        $region17: #{tpu_custom_call.1} parent=11 // pred_check
          %p187 = pneg %p99
        $region18: #{tpu_custom_call.1} parent=11 // pred_check_branch
          %189 = sbr.rel (%p187) target = $region20
        $region19: #{tpu_custom_call.1} parent=11 // pred_region
          _
        $region20: #{tpu_custom_call.1} parent=11 // pred_fallthru
          _
        // Predicated region
        $region21: #{tpu_custom_call.1} parent=11 // pred_check
          %p190 = pneg %p120
        $region22: #{tpu_custom_call.1} parent=11 // pred_check_branch
          %192 = sbr.rel (%p190) target = $region24
        $region23: #{tpu_custom_call.1} parent=11 // pred_region
          _
        $region24: #{tpu_custom_call.1} parent=11 // pred_fallthru
          _
        // Predicated region
        $region25: #{tpu_custom_call.1} parent=11 // pred_check
          %p193 = pneg %p141
        $region26: #{tpu_custom_call.1} parent=11 // pred_check_branch
          %195 = sbr.rel (%p193) target = $region28
        $region27: #{tpu_custom_call.1} parent=11 // pred_region
          _
        $region28: #{tpu_custom_call.1} parent=11 // pred_fallthru
          _
      $region12: #{tpu_custom_call.1} parent=5 // pred_fallthru
        _
      %p196 = scmp.lt.s32.totalorder %s17, 4
      // Predicated region
      $region29: #{tpu_custom_call.1} parent=5 // pred_check
        %p197 = pneg %p196
      $region30: #{tpu_custom_call.1} parent=5 // pred_check_branch
        %199 = sbr.rel (%p197) target = $region32
      $region31: #{tpu_custom_call.1} parent=5 // pred_region
        // Predicated region
        $region33: #{tpu_custom_call.1} parent=31 // pred_check
          %p200 = pneg %p51
        $region34: #{tpu_custom_call.1} parent=31 // pred_check_branch
          %202 = sbr.rel (%p200) target = $region36
        $region35: #{tpu_custom_call.1} parent=31 // pred_region
          %s203 = sand.u32 %s41, 1
          %s204 = scalar_lea.sflag [#allocation3], %s203
          %s205 = sand.u32 %s41, 1
          %s206 = smul.addr %s205, 16
          %s207 = scalar_lea.vmem [#allocation2], %s206
          %s209 = ssub.s32 256, 256
          %210 = vsyncadd %s204, %s209
          %s211 = smul.addr %s24, 4
          %s212 = sadd.s32 %s25, %s211
          %s213 = smul.addr %s212, 128
          %s214 = scalar_lea.hbm %s0, %s213
          %s215 = sshll.u32 %s207, 4
          %s216 = int_to_ptr.vmem [resolvable:$true] %s215
          %221 = dma.hbm_to_vmem [thread:$0]  %s214, 256, %s216, %s204, 256, 128, 8
        $region36: #{tpu_custom_call.1} parent=31 // pred_fallthru
          _
      $region32: #{tpu_custom_call.1} parent=5 // pred_fallthru
        _
      %p222 = scmp.le.s32.totalorder 1, %s17
      %p223 = scmp.lt.s32.totalorder %s17, 5
      %p224 = pnand %p222, %p223
      %p225 = pneg %p224
      // Predicated region
      $region37: #{tpu_custom_call.1} parent=5 // pred_check
        _
      $region38: #{tpu_custom_call.1} parent=5 // pred_check_branch
        %227 = sbr.rel (%p224) target = $region40
      $region39: #{tpu_custom_call.1} parent=5 // pred_region
        %s228 = ssub.s32 %s17, 1
        %s229 = sand.u32 %s44, 1
        %s230 = scalar_lea.sflag [#allocation3], %s229
        %s231 = sand.u32 %s44, 1
        %s232 = smul.addr %s231, 16
        %s233 = scalar_lea.vmem [#allocation2], %s232
        // Predicated region
        $region41: #{tpu_custom_call.1} parent=39 // pred_check
          %p234 = pneg %p57
        $region42: #{tpu_custom_call.1} parent=39 // pred_check_branch
          %236 = sbr.rel (%p234) target = $region44
        $region43: #{tpu_custom_call.1} parent=39 // pred_region
          %237 = dma.done %s230, 256
        $region44: #{tpu_custom_call.1} parent=39 // pred_fallthru
          _
        %s238 = sand.u32 %s44, 1
        %s239 = scalar_lea.sflag [#allocation3], %s238
        %s240 = sand.u32 %s44, 1
        %s241 = smul.addr %s240, 16
        %s242 = scalar_lea.vmem [#allocation2], %s241
        %p243 = pneg %p57
        %p244 = pneg %p54
        %p245 = pneg %p78
        %p246 = pneg %p75
        %p247 = pneg %p99
        %p248 = pneg %p96
        %p249 = pneg %p120
        %p250 = pneg %p117
        %p251 = pneg %p141
        %p252 = pneg %p138
        %p253 = pneg %p169
        %p254 = pneg %p166
        %s255 = sand.u32 %s156, 1
        %s256 = scalar_lea.sflag [#allocation4], %s255
        %s257 = sand.u32 %s156, 1
        %s258 = smul.addr %s257, 16
        %s259 = scalar_lea.vmem [#allocation5], %s258
        %v260 = vld [vmem:[%s233] sm:$0xff]
        %v261 = vld [vmem:[%s233 + $0x8] sm:$0xff]
        %v262 = vld [vmem:[%s1] sm:$0xff]
        %v263 = vld [vmem:[%s1 + $0x8] sm:$0xff]
        %265 = vset.pattern.permute.xlu0 0
        %266 = vperm.xlu0 %265, %v262
        %v267 = vpop.permute.xlu0 %266
        %270 = vset.pattern.permute.xlu0 0
        %271 = vperm.xlu0 %270, %v263
        %v272 = vpop.permute.xlu0 %271
        %v274 = vmul.f32 %v260, %v267
        %v275 = vmul.f32 %v261, %v272
        %v276 = vld [vmem:[%s2] sm:$0xff]
        %v277 = vld [vmem:[%s2 + $0x8] sm:$0xff]
        %279 = vset.pattern.permute.xlu0 0
        %280 = vperm.xlu0 %279, %v276
        %v281 = vpop.permute.xlu0 %280
        %284 = vset.pattern.permute.xlu0 0
        %285 = vperm.xlu0 %284, %v277
        %v286 = vpop.permute.xlu0 %285
        %v288 = vadd.f32 %v274, %v281
        %v289 = vadd.f32 %v275, %v286
        %v290 = vmax.f32 %v288, 0.0
        %v291 = vmax.f32 %v289, 0.0
        %v292 = vlaneseq
        %v293 = vand.u32 %v292, 127
        %vm294 = vcmp.lt.s32.totalorder %v293, 0
        %v295 = vsub.s32 0, %v293
        %v296 = vsel %vm294, %v295, %v293
        %v297 = vshrl.u32 %v296, 4
        %v298 = vand.u32 %v296, 15
        %v299 = vsub.s32 0, %v298
        %v300 = vsel %vm294, %v299, %v298
        %vm301 = vcmp.ne.s32.totalorder %v300, 0
        %vm302 = vcmp.lt.s32.totalorder %v300, 0
        %vm303 = vmand %vm302, %vm301
        %v304 = vadd.s32 %v300, 16
        %v305 = vsel %vm303, %v304, %v300
        %306 = vrot.lane.b32.xlu0 %v290, 1
        %v307 = vpop.permute.xlu0 %306
        %308 = vrot.lane.b32.xlu0 %v291, 1
        %v309 = vpop.permute.xlu0 %308
        %310 = vrot.lane.b32.xlu0 %v290, 127
        %v311 = vpop.permute.xlu0 %310
        %312 = vrot.lane.b32.xlu0 %v291, 127
        %v313 = vpop.permute.xlu0 %312
        %vm314 = vcmp.eq.s32.totalorder %v305, 0
        %v315 = vsel %vm314, 1, 0
        %vm316 = vcmp.eq.s32.totalorder %v315, 1
        %v317 = vsel %vm316, 0.0, %v307
        %v318 = vsel %vm316, 0.0, %v309
        %vm319 = vcmp.eq.s32.totalorder %v305, 15
        %v320 = vsel %vm319, 1, 0
        %vm321 = vcmp.eq.s32.totalorder %v320, 1
        %v322 = vsel %vm321, 0.0, %v311
        %v323 = vsel %vm321, 0.0, %v313
        %v324 = vld [vmem:[%s3] sm:$0xff]
        %v325 = vld [vmem:[%s3 + $0x8] sm:$0xff]
        %s326 = scalar_lea.vmem %s3, 16
        %v327 = vld [vmem:[%s326] sm:$0xff]
        %v328 = vld [vmem:[%s326 + $0x8] sm:$0xff]
        %vm329 = vcmask 130048
        %v331 = vsel %vm329, %v327, 0
        %v334 = vsel %vm329, %v328, 0
        %336 = vmatprep.subr.mxu0 0.0
        %337 = vmatpush1.msra.mxu0 %v290
        %338 = vmatprep.subr.mxu0 0.0
        %339 = vmatpush1.msra.mxu0 %v291
        %340 = vmatprep.subr.mxu0 0.0
        %341 = vmatpush1.msra.mxu0 0.0
        %342 = vmatprep.subr.mxu0 0.0
        %343 = vmatpush1.msra.mxu0 0.0
        %344 = vmatprep.subr.mxu0 0.0
        %345 = vmatpush1.msra.mxu0 0.0
        %346 = vmatprep.subr.mxu0 0.0
        %347 = vmatpush1.msra.mxu0 0.0
        %348 = vmatprep.subr.mxu0 0.0
        %349 = vmatpush1.msra.mxu0 0.0
        %350 = vmatprep.subr.mxu0 0.0
        %351 = vmatpush1.msra.mxu0 0.0
        %352 = vmatprep.subr.mxu0 0.0
        %353 = vmatpush1.msra.mxu0 0.0
        %354 = vmatprep.subr.mxu0 0.0
        %355 = vmatpush1.msra.mxu0 0.0
        %356 = vmatprep.subr.mxu0 0.0
        %357 = vmatpush1.msra.mxu0 0.0
        %358 = vmatprep.subr.mxu0 0.0
        %359 = vmatpush1.msra.mxu0 0.0
        %360 = vmatprep.subr.mxu0 0.0
        %361 = vmatpush1.msra.mxu0 0.0
        %362 = vmatprep.subr.mxu0 0.0
        %363 = vmatpush1.msra.mxu0 0.0
        %364 = vmatprep.subr.mxu0 0.0
        %365 = vmatpush1.msra.mxu0 0.0
        %366 = vmatprep.subr.mxu0 0.0
        %367 = vmatpush1.msra.mxu0 0.0
        %368 = vmatprep.subr.mxu0 0.0
        %369 = vmatpush1.msra.mxu0 0.0
        %370 = vmatprep.subr.mxu0 0.0
        %371 = vmatpush1.msra.mxu0 0.0
        %372 = vmatprep.subr.mxu0 0.0
        %373 = vmatpush1.msra.mxu0 0.0
        %374 = vmatprep.subr.mxu0 0.0
        %375 = vmatpush1.msra.mxu0 0.0
        %376 = vmatprep.subr.mxu0 0.0
        %377 = vmatpush1.msra.mxu0 0.0
        %378 = vmatprep.subr.mxu0 0.0
        %379 = vmatpush1.msra.mxu0 0.0
        %380 = vmatprep.subr.mxu0 0.0
        %381 = vmatpush1.msra.mxu0 0.0
        %382 = vmatprep.subr.mxu0 0.0
        %383 = vmatpush1.msra.mxu0 0.0
        %384 = vmatprep.subr.mxu0 0.0
        %385 = vmatpush1.msra.mxu0 0.0
        %386 = vmatprep.subr.mxu0 0.0
        %387 = vmatpush1.msra.mxu0 0.0
        %388 = vmatprep.subr.mxu0 0.0
        %389 = vmatpush1.msra.mxu0 0.0
        %390 = vmatprep.subr.mxu0 0.0
        %391 = vmatpush1.msra.mxu0 0.0
        %392 = vmatprep.subr.mxu0 0.0
        %393 = vmatpush1.msra.mxu0 0.0
        %394 = vmatprep.subr.mxu0 0.0
        %395 = vmatpush1.msra.mxu0 0.0
        %396 = vmatprep.subr.mxu0 0.0
        %397 = vmatpush1.msra.mxu0 0.0
        %398 = vmatprep.subr.mxu0 0.0
        %399 = vmatpush1.msra.mxu0 0.0
        %400 = vmatprep.mubr.f32.mxu0 0.0
        %401 = vmatmul.mubr.f32.gmra.mrb[0].mxu0 %v331
        %v402 = vpop.f32.mrb[0].mxu0
        %v403 = vadd.f32 0.0, %v402
        %v404 = vpop.f32.mrb[0].mxu0
        %405 = vmatprep.mubr.f32.mxu0 0.0
        %406 = vmatmul.mubr.f32.gmra.mrb[0].mxu0 %v334
        %v407 = vpop.f32.mrb[0].mxu0
        %v408 = vadd.f32 0.0, %v407
        %v409 = vpop.f32.mrb[0].mxu0
        %410 = vdwg.mxu0
        %v412 = vsel %vm329, %v324, 0
        %v415 = vsel %vm329, %v325, 0
        %417 = vmatprep.subr.mxu0 0.0
        %418 = vmatpush1.msra.mxu0 %v317
        %419 = vmatprep.subr.mxu0 0.0
        %420 = vmatpush1.msra.mxu0 %v318
        %421 = vmatprep.subr.mxu0 0.0
        %422 = vmatpush1.msra.mxu0 0.0
        %423 = vmatprep.subr.mxu0 0.0
        %424 = vmatpush1.msra.mxu0 0.0
        %425 = vmatprep.subr.mxu0 0.0
        %426 = vmatpush1.msra.mxu0 0.0
        %427 = vmatprep.subr.mxu0 0.0
        %428 = vmatpush1.msra.mxu0 0.0
        %429 = vmatprep.subr.mxu0 0.0
        %430 = vmatpush1.msra.mxu0 0.0
        %431 = vmatprep.subr.mxu0 0.0
        %432 = vmatpush1.msra.mxu0 0.0
        %433 = vmatprep.subr.mxu0 0.0
        %434 = vmatpush1.msra.mxu0 0.0
        %435 = vmatprep.subr.mxu0 0.0
        %436 = vmatpush1.msra.mxu0 0.0
        %437 = vmatprep.subr.mxu0 0.0
        %438 = vmatpush1.msra.mxu0 0.0
        %439 = vmatprep.subr.mxu0 0.0
        %440 = vmatpush1.msra.mxu0 0.0
        %441 = vmatprep.subr.mxu0 0.0
        %442 = vmatpush1.msra.mxu0 0.0
        %443 = vmatprep.subr.mxu0 0.0
        %444 = vmatpush1.msra.mxu0 0.0
        %445 = vmatprep.subr.mxu0 0.0
        %446 = vmatpush1.msra.mxu0 0.0
        %447 = vmatprep.subr.mxu0 0.0
        %448 = vmatpush1.msra.mxu0 0.0
        %449 = vmatprep.subr.mxu0 0.0
        %450 = vmatpush1.msra.mxu0 0.0
        %451 = vmatprep.subr.mxu0 0.0
        %452 = vmatpush1.msra.mxu0 0.0
        %453 = vmatprep.subr.mxu0 0.0
        %454 = vmatpush1.msra.mxu0 0.0
        %455 = vmatprep.subr.mxu0 0.0
        %456 = vmatpush1.msra.mxu0 0.0
        %457 = vmatprep.subr.mxu0 0.0
        %458 = vmatpush1.msra.mxu0 0.0
        %459 = vmatprep.subr.mxu0 0.0
        %460 = vmatpush1.msra.mxu0 0.0
        %461 = vmatprep.subr.mxu0 0.0
        %462 = vmatpush1.msra.mxu0 0.0
        %463 = vmatprep.subr.mxu0 0.0
        %464 = vmatpush1.msra.mxu0 0.0
        %465 = vmatprep.subr.mxu0 0.0
        %466 = vmatpush1.msra.mxu0 0.0
        %467 = vmatprep.subr.mxu0 0.0
        %468 = vmatpush1.msra.mxu0 0.0
        %469 = vmatprep.subr.mxu0 0.0
        %470 = vmatpush1.msra.mxu0 0.0
        %471 = vmatprep.subr.mxu0 0.0
        %472 = vmatpush1.msra.mxu0 0.0
        %473 = vmatprep.subr.mxu0 0.0
        %474 = vmatpush1.msra.mxu0 0.0
        %475 = vmatprep.subr.mxu0 0.0
        %476 = vmatpush1.msra.mxu0 0.0
        %477 = vmatprep.subr.mxu0 0.0
        %478 = vmatpush1.msra.mxu0 0.0
        %479 = vmatprep.subr.mxu0 0.0
        %480 = vmatpush1.msra.mxu0 0.0
        %481 = vmatprep.mubr.f32.mxu0 0.0
        %482 = vmatmul.mubr.f32.gmra.mrb[0].mxu0 %v412
        %v483 = vpop.f32.mrb[0].mxu0
        %v484 = vadd.f32 %v403, %v483
        %v485 = vpop.f32.mrb[0].mxu0
        %486 = vmatprep.mubr.f32.mxu0 0.0
        %487 = vmatmul.mubr.f32.gmra.mrb[0].mxu0 %v415
        %v488 = vpop.f32.mrb[0].mxu0
        %v489 = vadd.f32 %v408, %v488
        %v490 = vpop.f32.mrb[0].mxu0
        %491 = vdwg.mxu0
        %s492 = scalar_lea.vmem %s3, 32
        %v493 = vld [vmem:[%s492] sm:$0xff]
        %v494 = vld [vmem:[%s492 + $0x8] sm:$0xff]
        %v496 = vsel %vm329, %v493, 0
        %v499 = vsel %vm329, %v494, 0
        %501 = vmatprep.subr.mxu0 0.0
        %502 = vmatpush1.msra.mxu0 %v322
        %503 = vmatprep.subr.mxu0 0.0
        %504 = vmatpush1.msra.mxu0 %v323
        %505 = vmatprep.subr.mxu0 0.0
        %506 = vmatpush1.msra.mxu0 0.0
        %507 = vmatprep.subr.mxu0 0.0
        %508 = vmatpush1.msra.mxu0 0.0
        %509 = vmatprep.subr.mxu0 0.0
        %510 = vmatpush1.msra.mxu0 0.0
        %511 = vmatprep.subr.mxu0 0.0
        %512 = vmatpush1.msra.mxu0 0.0
        %513 = vmatprep.subr.mxu0 0.0
        %514 = vmatpush1.msra.mxu0 0.0
        %515 = vmatprep.subr.mxu0 0.0
        %516 = vmatpush1.msra.mxu0 0.0
        %517 = vmatprep.subr.mxu0 0.0
        %518 = vmatpush1.msra.mxu0 0.0
        %519 = vmatprep.subr.mxu0 0.0
        %520 = vmatpush1.msra.mxu0 0.0
        %521 = vmatprep.subr.mxu0 0.0
        %522 = vmatpush1.msra.mxu0 0.0
        %523 = vmatprep.subr.mxu0 0.0
        %524 = vmatpush1.msra.mxu0 0.0
        %525 = vmatprep.subr.mxu0 0.0
        %526 = vmatpush1.msra.mxu0 0.0
        %527 = vmatprep.subr.mxu0 0.0
        %528 = vmatpush1.msra.mxu0 0.0
        %529 = vmatprep.subr.mxu0 0.0
        %530 = vmatpush1.msra.mxu0 0.0
        %531 = vmatprep.subr.mxu0 0.0
        %532 = vmatpush1.msra.mxu0 0.0
        %533 = vmatprep.subr.mxu0 0.0
        %534 = vmatpush1.msra.mxu0 0.0
        %535 = vmatprep.subr.mxu0 0.0
        %536 = vmatpush1.msra.mxu0 0.0
        %537 = vmatprep.subr.mxu0 0.0
        %538 = vmatpush1.msra.mxu0 0.0
        %539 = vmatprep.subr.mxu0 0.0
        %540 = vmatpush1.msra.mxu0 0.0
        %541 = vmatprep.subr.mxu0 0.0
        %542 = vmatpush1.msra.mxu0 0.0
        %543 = vmatprep.subr.mxu0 0.0
        %544 = vmatpush1.msra.mxu0 0.0
        %545 = vmatprep.subr.mxu0 0.0
        %546 = vmatpush1.msra.mxu0 0.0
        %547 = vmatprep.subr.mxu0 0.0
        %548 = vmatpush1.msra.mxu0 0.0
        %549 = vmatprep.subr.mxu0 0.0
        %550 = vmatpush1.msra.mxu0 0.0
        %551 = vmatprep.subr.mxu0 0.0
        %552 = vmatpush1.msra.mxu0 0.0
        %553 = vmatprep.subr.mxu0 0.0
        %554 = vmatpush1.msra.mxu0 0.0
        %555 = vmatprep.subr.mxu0 0.0
        %556 = vmatpush1.msra.mxu0 0.0
        %557 = vmatprep.subr.mxu0 0.0
        %558 = vmatpush1.msra.mxu0 0.0
        %559 = vmatprep.subr.mxu0 0.0
        %560 = vmatpush1.msra.mxu0 0.0
        %561 = vmatprep.subr.mxu0 0.0
        %562 = vmatpush1.msra.mxu0 0.0
        %563 = vmatprep.subr.mxu0 0.0
        %564 = vmatpush1.msra.mxu0 0.0
        %565 = vmatprep.mubr.f32.mxu0 0.0
        %566 = vmatmul.mubr.f32.gmra.mrb[0].mxu0 %v496
        %v567 = vpop.f32.mrb[0].mxu0
        %v568 = vadd.f32 0.0, %v567
        %v569 = vpop.f32.mrb[0].mxu0
        %570 = vmatprep.mubr.f32.mxu0 0.0
        %571 = vmatmul.mubr.f32.gmra.mrb[0].mxu0 %v499
        %v572 = vpop.f32.mrb[0].mxu0
        %v573 = vadd.f32 0.0, %v572
        %v574 = vpop.f32.mrb[0].mxu0
        %575 = vdwg.mxu0
        %v576 = vadd.f32 %v484, %v568
        %v577 = vadd.f32 %v489, %v573
        %v578 = vld [vmem:[%s4] sm:$0xff]
        %v579 = vld [vmem:[%s4 + $0x8] sm:$0xff]
        %581 = vset.pattern.permute.xlu0 0
        %582 = vperm.xlu0 %581, %v578
        %v583 = vpop.permute.xlu0 %582
        %586 = vset.pattern.permute.xlu0 0
        %587 = vperm.xlu0 %586, %v579
        %v588 = vpop.permute.xlu0 %587
        %v590 = vadd.f32 %v576, %v583
        %v591 = vadd.f32 %v577, %v588
        %v592 = vadd.f32 %v590, %v260
        %v593 = vadd.f32 %v591, %v261
        %v594 = vmax.f32 %v592, 0.0
        %v595 = vmax.f32 %v593, 0.0
        %596 = vst [vmem:[%s259] sm:$0xff] %v594
        %597 = vst [vmem:[%s259 + $0x8] sm:$0xff] %v595
        %s598 = sand.u32 %s156, 1
        %s599 = scalar_lea.sflag [#allocation4], %s598
        %s600 = sand.u32 %s156, 1
        %s601 = smul.addr %s600, 16
        %s602 = scalar_lea.vmem [#allocation5], %s601
        // Predicated region
        $region45: #{tpu_custom_call.1} parent=39 // pred_check
          %p603 = pneg %p166
        $region46: #{tpu_custom_call.1} parent=39 // pred_check_branch
          %605 = sbr.rel (%p603) target = $region48
        $region47: #{tpu_custom_call.1} parent=39 // pred_region
          %s607 = ssub.s32 256, 256
          %608 = vsyncadd %s599, %s607
          %s609 = smul.addr %s26, 4
          %s610 = sadd.s32 %s27, %s609
          %s611 = smul.addr %s610, 128
          %s612 = scalar_lea.hbm %s5, %s611
          %s613 = sshll.u32 %s602, 4
          %s614 = int_to_ptr.vmem [resolvable:$true] %s613
          %619 = dma.vmem_to_hbm [thread:$0]  %s614, 256, %s612, %s599, 128, 256, 8
        $region48: #{tpu_custom_call.1} parent=39 // pred_fallthru
          _
      $region40: #{tpu_custom_call.1} parent=5 // pred_fallthru
        _
      %p620 = scmp.le.s32.totalorder 2, %s17
      // Predicated region
      $region49: #{tpu_custom_call.1} parent=5 // pred_check
        %p621 = pneg %p620
      $region50: #{tpu_custom_call.1} parent=5 // pred_check_branch
        %623 = sbr.rel (%p621) target = $region52
      $region51: #{tpu_custom_call.1} parent=5 // pred_region
        %s624 = ssub.s32 %s17, 2
        // Predicated region
        $region53: #{tpu_custom_call.1} parent=51 // pred_check
          %p625 = pneg %p172
        $region54: #{tpu_custom_call.1} parent=51 // pred_check_branch
          %627 = sbr.rel (%p625) target = $region56
        $region55: #{tpu_custom_call.1} parent=51 // pred_region
          %s628 = sand.u32 %s157, 1
          %s629 = scalar_lea.sflag [#allocation4], %s628
          %s630 = sand.u32 %s157, 1
          %s631 = smul.addr %s630, 16
          %s632 = scalar_lea.vmem [#allocation5], %s631
          %633 = dma.done %s629, 256
        $region56: #{tpu_custom_call.1} parent=51 // pred_fallthru
          _
      $region52: #{tpu_custom_call.1} parent=5 // pred_fallthru
        _
    $region6: #{tpu_custom_call.1} parent=1 // loop_footer
      %s21 = sadd.s32 1, %s17
    $region7: #{tpu_custom_call.1} parent=1 // loop_footer_branch
      %16 = sbr.rel target = $region3
    $region8: #{tpu_custom_call.1} parent=1 // loop_exit
      _
    %634 = vsyncpa [#allocation3], 1
    %s635 = scalar_lea.sflag [#allocation3], 1
    %636 = vsyncpa %s635, 1
    %637 = vsyncpa [#allocation4], 1
    %s638 = scalar_lea.sflag [#allocation4], 1
    %639 = vsyncpa %s638, 1

</llo_original>
